<compile_context>
chip_gen: v6e
topology: v6e:2x2x1
jax: 0.10.0
libtpu: 0.0.40
codegen_flags: <defaults>
</compile_context>

<pallas_src>
import functools

import jax
import jax.numpy as jnp
from jax.experimental import pallas as pl
from jax.experimental.pallas import tpu as pltpu

LANE = 128          # TPU lane width; hidden/action dims are lane-padded to this
HIDDEN = 32         # fixed by the PyTorch module (fc1 out / fc2 in)


def _round_up(n, m):
    return (n + m - 1) // m * m


def pack_params(w1, b1, w2, b2):
    """Pack (w1,b1,w2,b2) into one bf16 weight slab + one f32 bias slab (lane-dense).

    Weight slab (bf16, shape (OBS_P + 128, 128)):
      rows [0 : OBS_P)          -> w1 zero-padded to (OBS_P, 128)
      rows [OBS_P : OBS_P+128)  -> w2 zero-padded to (128, 128)
    Bias slab (f32, shape (8, 128)): row 0 = b1 (padded), row 1 = b2 (padded).
    """
    obs, hid = w1.shape
    act = w2.shape[1]
    assert hid == HIDDEN and hid <= LANE and act <= LANE
    obs_p = _round_up(obs, 16)  # bf16 sublane-pack alignment -> tile-aligned slab slices

    w1p = jnp.zeros((obs_p, LANE), jnp.bfloat16)
    w1p = w1p.at[:obs, :hid].set(w1.astype(jnp.bfloat16))
    w2p = jnp.zeros((LANE, LANE), jnp.bfloat16)
    w2p = w2p.at[:hid, :act].set(w2.astype(jnp.bfloat16))
    w_slab = jnp.concatenate([w1p, w2p], axis=0)          # (obs_p + 128, 128) bf16

    b_slab = jnp.zeros((8, LANE), jnp.float32)
    b_slab = b_slab.at[0, :hid].set(jnp.reshape(b1, (-1,)).astype(jnp.float32))
    b_slab = b_slab.at[1, :act].set(jnp.reshape(b2, (-1,)).astype(jnp.float32))
    return w_slab, b_slab


def _actor_kernel(x_ref, w_ref, b_ref, o_ref, *, obs_p):
    # x_ref: (tile_b, obs_p) f32 | w_ref: (obs_p+128, 128) bf16 | b_ref: (8, 128) f32
    # o_ref: (tile_b, action_space) f32  (narrow store; masked vst accepted)
    x = x_ref[...].astype(jnp.bfloat16)   # in-kernel cast: activations stream in as f32
    w1 = w_ref[:obs_p, :]                 # static, 16-row-aligned slices -> views
    w2 = w_ref[obs_p:, :]
    b1 = b_ref[0:1, :]                    # (1, 128) f32 broadcast adds
    b2 = b_ref[1:2, :]

    # Layer 1 with fused bias/ReLU epilogue, f32 accumulation on the MXU.
    h = jnp.dot(x, w1, preferred_element_type=jnp.float32) + b1
    h = jnp.maximum(h, 0.0).astype(jnp.bfloat16)
    # Layer 2. Lanes >= action_space of w2/b2 are exactly zero, so the narrow
    # lane-slice below is exact.
    out = jnp.dot(h, w2, preferred_element_type=jnp.float32) + b2
    o_ref[...] = out[:, : o_ref.shape[1]].astype(o_ref.dtype)


def _choose_tile_b(batch):
    if batch <= 256:
        # One grid step: at these sizes per-call/dispatch overhead dominates and
        # splitting across TCs only adds per-step cost.
        return _round_up(batch, 8)
    # Double-buffered in+out blocks at tile_b=2048 are ~4.5 MiB (the (tile_b, 16) f32
    # x block is lane-padded to 128 in VMEM), comfortably under v7x's 32 MiB scoped
    # / 64 MiB physical VMEM and the 128 MiB of v5e/v6e.
    max_tile = 2048
    steps = max(2, 2 * pl.cdiv(batch, 2 * max_tile))   # even step count -> balanced TCs
    return min(max_tile, _round_up(pl.cdiv(batch, steps), 256))


def actor_net_forward(x, w_slab, b_slab, action_space, *, tile_b=None):
    """x: (B, obs) f32 -> (B, action_space) f32."""
    batch, obs = x.shape
    obs_p = w_slab.shape[0] - LANE
    assert obs <= obs_p

    # Only the feature axis is padded, and only when obs isn't 16-aligned (not the
    # common case). Never pad the batch axis and never pre-cast: batch raggedness is
    # handled by the grid's partial last block (rows are independent; OOB writes masked).
    if obs != obs_p:
        x = jnp.pad(x, ((0, 0), (0, obs_p - obs)))

    if tile_b is None:
        tile_b = _choose_tile_b(batch)

    # TODO(synk): for tiny rollout batches (B <= ~64) a plain fused XLA dot-relu-dot can
    # beat any pallas_call on pure dispatch latency; keep this path for batched eval.
    kernel = functools.partial(_actor_kernel, obs_p=obs_p)
    out = pl.pallas_call(
        kernel,
        out_shape=jax.ShapeDtypeStruct((batch, action_space), jnp.float32),
        grid=(pl.cdiv(batch, tile_b),),
        in_specs=[
            # activations: f32 straight from HBM, tiled over batch, pipelined
            pl.BlockSpec((tile_b, obs_p), lambda i: (i, 0)),
            # packed weights / biases: constant index_map -> VMEM-resident, no re-DMA
            pl.BlockSpec((obs_p + LANE, LANE), lambda i: (0, 0)),
            pl.BlockSpec((8, LANE), lambda i: (0, 0)),
        ],
        # Narrow output block: last dim == full array dim (legal); trades a masked vst
        # for ~32x fewer store bytes and removes the post-kernel slice dispatch.
        out_specs=pl.BlockSpec((tile_b, action_space), lambda i: (i, 0)),
        compiler_params=pltpu.CompilerParams(
            dimension_semantics=("parallel",),        # shard batch grid across TCs (v7x)
            vmem_limit_bytes=32 * 1024 * 1024,        # explicit; safe on v5e/v6e/v7x
        ),
    )(x, w_slab, b_slab)
    return out


def init_params(key, obs_space, action_space, hidden=HIDDEN):
    # Deterministic PyTorch-style init, bound = 1/sqrt(fan_in).
    k1, k2, k3, k4 = jax.random.split(key, 4)
    bound1 = 1.0 / jnp.sqrt(obs_space)
    bound2 = 1.0 / jnp.sqrt(hidden)
    w1 = jax.random.uniform(k1, (obs_space, hidden), jnp.float32, -bound1, bound1)
    b1 = jax.random.uniform(k2, (1, hidden), jnp.float32, -bound1, bound1)
    w2 = jax.random.uniform(k3, (hidden, action_space), jnp.float32, -bound2, bound2)
    b2 = jax.random.uniform(k4, (1, action_space), jnp.float32, -bound2, bound2)
    return w1, b1, w2, b2


if __name__ == "__main__":
    obs_space, action_space, batch = 16, 4, 8
    key = jax.random.PRNGKey(0)
    kx, kp = jax.random.split(key)
    x = jax.random.normal(kx, (batch, obs_space), jnp.float32)
    w1, b1, w2, b2 = init_params(kp, obs_space, action_space)

    # Pack once; reused across calls (weights stay as two small device arrays).
    w_slab, b_slab = pack_params(w1, b1, w2, b2)

    out = actor_net_forward(x, w_slab, b_slab, action_space)
    jax.block_until_ready(out)
    assert out.shape == (batch, action_space)

    # Reference mirroring the kernel's bf16-input / f32-accumulate numerics.
    xb = x.astype(jnp.bfloat16).astype(jnp.float32)
    w1b = w1.astype(jnp.bfloat16).astype(jnp.float32)
    w2b = w2.astype(jnp.bfloat16).astype(jnp.float32)
    h_ref = jnp.maximum(xb @ w1b + b1, 0.0).astype(jnp.bfloat16).astype(jnp.float32)
    ref_bf16 = h_ref @ w2b + b2
    assert jnp.allclose(out, ref_bf16, atol=1e-3, rtol=1e-3)

    # Loose sanity check against the pure-f32 PyTorch-equivalent forward.
    ref_f32 = jnp.maximum(x @ w1 + b1, 0.0) @ w2 + b2
    assert jnp.allclose(out, ref_f32, atol=5e-2, rtol=5e-2)

    print("KERNEL_OK")
</pallas_src>

<mosaic_0001>
module attributes {stable_mosaic.version = 11 : i64} {
  func.func @_actor_kernel(%arg0: i32, %arg1: memref<8x16xf32, #tpu.memory_space<vmem>>, %arg2: memref<144x128xbf16, #tpu.memory_space<vmem>>, %arg3: memref<8x128xf32, #tpu.memory_space<vmem>>, %arg4: memref<8x4xf32, #tpu.memory_space<vmem>>) attributes {dimension_semantics = [#tpu.dimension_semantics<parallel>], iteration_bounds = array<i64: 1>, scalar_prefetch = 0 : i64, scratch_operands = 0 : i64, tpu.core_type = #tpu.core_type<tc>, window_params = [{transform_indices = @transform_0, window_bounds = array<i64: 8, 16>}, {pipeline_mode = #tpu.pipeline_mode<synchronous>, transform_indices = @transform_1, window_bounds = array<i64: 144, 128>}, {pipeline_mode = #tpu.pipeline_mode<synchronous>, transform_indices = @transform_2, window_bounds = array<i64: 8, 128>}, {transform_indices = @transform_3, window_bounds = array<i64: 8, 4>}]} {
    %c0 = arith.constant 0 : index
    %c0_0 = arith.constant 0 : index
    %0 = vector.load %arg1[%c0, %c0_0] : memref<8x16xf32, #tpu.memory_space<vmem>>, vector<8x16xf32>
    %1 = arith.truncf %0 : vector<8x16xf32> to vector<8x16xbf16>
    %c0_1 = arith.constant 0 : index
    %c0_2 = arith.constant 0 : index
    %2 = vector.load %arg2[%c0_1, %c0_2] : memref<144x128xbf16, #tpu.memory_space<vmem>>, vector<16x128xbf16>
    %c16 = arith.constant 16 : index
    %c0_3 = arith.constant 0 : index
    %3 = vector.load %arg2[%c16, %c0_3] : memref<144x128xbf16, #tpu.memory_space<vmem>>, vector<128x128xbf16>
    %c0_4 = arith.constant 0 : index
    %c0_5 = arith.constant 0 : index
    %4 = vector.load %arg3[%c0_4, %c0_5] : memref<8x128xf32, #tpu.memory_space<vmem>>, vector<1x128xf32>
    %c1 = arith.constant 1 : index
    %c0_6 = arith.constant 0 : index
    %5 = vector.load %arg3[%c1, %c0_6] : memref<8x128xf32, #tpu.memory_space<vmem>>, vector<1x128xf32>
    %cst = arith.constant dense<0.000000e+00> : vector<8x128xf32>
    %6 = tpu.matmul %1, %2, %cst {dimension_numbers = #tpu.dot_dimension_numbers<[1], [0], [0], [1], [0, 0, 1, 1], [], []>} : vector<8x16xbf16>, vector<16x128xbf16>, vector<8x128xf32> -> vector<8x128xf32>
    %7 = vector.broadcast %4 : vector<1x128xf32> to vector<8x128xf32>
    %8 = arith.addf %6, %7 : vector<8x128xf32>
    %cst_7 = arith.constant 0.000000e+00 : f32
    %9 = vector.broadcast %cst_7 : f32 to vector<8x128xf32>
    %10 = arith.maximumf %8, %9 : vector<8x128xf32>
    %11 = arith.truncf %10 : vector<8x128xf32> to vector<8x128xbf16>
    %cst_8 = arith.constant dense<0.000000e+00> : vector<8x128xf32>
    %12 = tpu.matmul %11, %3, %cst_8 {dimension_numbers = #tpu.dot_dimension_numbers<[1], [0], [0], [1], [0, 0, 1, 1], [], []>} : vector<8x128xbf16>, vector<128x128xbf16>, vector<8x128xf32> -> vector<8x128xf32>
    %13 = vector.broadcast %5 : vector<1x128xf32> to vector<8x128xf32>
    %14 = arith.addf %12, %13 : vector<8x128xf32>
    %15 = vector.extract_strided_slice %14 {offsets = [0, 0], sizes = [8, 4], strides = [1, 1]} : vector<8x128xf32> to vector<8x4xf32>
    %c0_9 = arith.constant 0 : index
    %c0_10 = arith.constant 0 : index
    %16 = vector.load %arg4[%c0_9, %c0_10] : memref<8x4xf32, #tpu.memory_space<vmem>>, vector<8x4xf32>
    tpu.vector_store %arg4[%c0_9, %c0_10], %15 {strides = array<i32>} : memref<8x4xf32, #tpu.memory_space<vmem>>, vector<8x4xf32>,
    return
  }
  func.func @transform_0(%arg0: i32) -> (i32, i32) {
    %c0_i32 = arith.constant 0 : i32
    %c0_i32_0 = arith.constant 0 : i32
    return %arg0, %c0_i32 : i32, i32
  }
  func.func @transform_1(%arg0: i32) -> (i32, i32) {
    %c0_i32 = arith.constant 0 : i32
    %c0_i32_0 = arith.constant 0 : i32
    %c0_i32_1 = arith.constant 0 : i32
    return %c0_i32, %c0_i32_0 : i32, i32
  }
  func.func @transform_2(%arg0: i32) -> (i32, i32) {
    %c0_i32 = arith.constant 0 : i32
    %c0_i32_0 = arith.constant 0 : i32
    %c0_i32_1 = arith.constant 0 : i32
    return %c0_i32, %c0_i32_0 : i32, i32
  }
  func.func @transform_3(%arg0: i32) -> (i32, i32) {
    %c0_i32 = arith.constant 0 : i32
    %c0_i32_0 = arith.constant 0 : i32
    return %arg0, %c0_i32 : i32, i32
  }
}

</mosaic_0001>

<llo_original>
// kernel: tpu_custom_call.1
$region0: #{tpu_custom_call.1}
  #allocation0 [shape = 'u32[]', space=smem, size = 0x4, offset = 0x4, fixed_abs, tag = 'smem constant byte address 0x4 - core index']
  #allocation1 [shape = 'u32[144,128]{1,0:T(1,128)}', space=vmem, size = 0x12000, scoped, tag = 'internal scratch']
  %s0 = inlined_call_operand.hbm [shape: f32[8,16], index: 0, kind: input, shape index: {}]
  %s1 = inlined_call_operand.hbm [shape: bf16[144,128], index: 1, kind: input, shape index: {}]
  %s2 = inlined_call_operand.hbm [shape: f32[8,128], index: 2, kind: input, shape index: {}]
  %s3 = inlined_call_operand.vmem [shape: f32[8,4], index: 3, kind: output, shape index: {}]
  %s4 = sld [smem:[#allocation0]]
  $region34: #{tpu_custom_call.1} parent=0
    _
  %s6 = ssub.s32 1, %s4
  %s7 = scalar_select 0, %s6, %s4
  $region1: #{tpu_custom_call.1} parent=0
    #allocation2 [shape = 'u8[4096]{0}', space=vmem, size = 0x1000, scoped, tag = 'input window, operand 0, single buffered']
    #allocation3 [shape = 's32[1]{0}', space=sflag, size = 0x4, scoped, tag = 'scoped memory for tpu_custom_call.1']
    #allocation4 [shape = 'u8[36864]{0}', space=vmem, size = 0x9000, scoped, tag = 'input window, operand 1, single buffered']
    #allocation5 [shape = 's32[1]{0}', space=sflag, size = 0x4, scoped, tag = 'scoped memory for tpu_custom_call.1']
    #allocation6 [shape = 'u8[4096]{0}', space=vmem, size = 0x1000, scoped, tag = 'input window, operand 2, single buffered']
    %8 = vsyncpa [#allocation3], 0
    %9 = vsyncpa [#allocation5], 0
    // Predicated region
    $region2: #{tpu_custom_call.1} parent=1 // pred_check
      _
    $region3: #{tpu_custom_call.1} parent=1 // pred_check_branch
      %11 = sbr.rel (0) target = $region5
    $region4: #{tpu_custom_call.1} parent=1 // pred_region
      %s13 = ssub.s32 128, 128
      %14 = vsyncadd [#allocation3], %s13
      %s16 = sshll.u32 [#allocation2], 4
      %s17 = int_to_ptr.vmem [resolvable:$true] %s16
      %19 = dma.hbm_to_vmem [thread:$0]  %s0, 128, %s17, [#allocation3]
    $region5: #{tpu_custom_call.1} parent=1 // pred_fallthru
      _
    // Predicated region
    $region6: #{tpu_custom_call.1} parent=1 // pred_check
      _
    $region7: #{tpu_custom_call.1} parent=1 // pred_check_branch
      %21 = sbr.rel (0) target = $region9
    $region8: #{tpu_custom_call.1} parent=1 // pred_region
      %s23 = ssub.s32 1152, 1152
      %24 = vsyncadd [#allocation5], %s23
      %s25 = sshll.u32 [#allocation4], 4
      %s26 = int_to_ptr.vmem [resolvable:$true] %s25
      %31 = dma.hbm_to_vmem [thread:$0]  %s1, 1152, %s26, [#allocation5], 64, 64, 4
    $region9: #{tpu_custom_call.1} parent=1 // pred_fallthru
      _
    // Predicated region
    $region10: #{tpu_custom_call.1} parent=1 // pred_check
      _
    $region11: #{tpu_custom_call.1} parent=1 // pred_check_branch
      %33 = sbr.rel (0) target = $region13
    $region12: #{tpu_custom_call.1} parent=1 // pred_region
      %s35 = ssub.s32 128, 128
      %36 = vsyncadd [#allocation5], %s35
      %s38 = sshll.u32 [#allocation6], 4
      %s39 = int_to_ptr.vmem [resolvable:$true] %s38
      %41 = dma.hbm_to_vmem [thread:$0]  %s2, 128, %s39, [#allocation5]
    $region13: #{tpu_custom_call.1} parent=1 // pred_fallthru
      _
    // Predicated region
    $region14: #{tpu_custom_call.1} parent=1 // pred_check
      _
    $region15: #{tpu_custom_call.1} parent=1 // pred_check_branch
      %43 = sbr.rel (0) target = $region17
    $region16: #{tpu_custom_call.1} parent=1 // pred_region
      %44 = dma.done [#allocation3], 128
    $region17: #{tpu_custom_call.1} parent=1 // pred_fallthru
      _
    // Predicated region
    $region18: #{tpu_custom_call.1} parent=1 // pred_check
      _
    $region19: #{tpu_custom_call.1} parent=1 // pred_check_branch
      %46 = sbr.rel (0) target = $region21
    $region20: #{tpu_custom_call.1} parent=1 // pred_region
      %47 = dma.done [#allocation5], 1152
    $region21: #{tpu_custom_call.1} parent=1 // pred_fallthru
      _
    // Predicated region
    $region22: #{tpu_custom_call.1} parent=1 // pred_check
      _
    $region23: #{tpu_custom_call.1} parent=1 // pred_check_branch
      %49 = sbr.rel (0) target = $region25
    $region24: #{tpu_custom_call.1} parent=1 // pred_region
      %50 = dma.done [#allocation5], 128
    $region25: #{tpu_custom_call.1} parent=1 // pred_fallthru
      _
    %v52 = vld [vmem:[#allocation2] sm:$0xff]
    %v53 = vpack.c.bf16 %v52, %v52
    %v54 = vld [vmem:[#allocation4] sm:$0xf]
    %v55 = vld [vmem:[#allocation4 + $0x4] sm:$0xf]
    %v56 = vld [vmem:[#allocation4 + $0x8] sm:$0xf]
    %v57 = vld [vmem:[#allocation4 + $0xc] sm:$0xf]
    %v58 = vld [vmem:[#allocation4 + $0x10] sm:$0xf]
    %v59 = vld [vmem:[#allocation4 + $0x14] sm:$0xf]
    %v60 = vld [vmem:[#allocation4 + $0x18] sm:$0xf]
    %v61 = vld [vmem:[#allocation4 + $0x1c] sm:$0xf]
    %v62 = vld [vmem:[#allocation4 + $0x20] sm:$0xf]
    %v63 = vld [vmem:[#allocation4 + $0x24] sm:$0xf]
    %v64 = vld [vmem:[#allocation4 + $0x28] sm:$0xf]
    %v65 = vld [vmem:[#allocation4 + $0x2c] sm:$0xf]
    %v66 = vld [vmem:[#allocation4 + $0x30] sm:$0xf]
    %v67 = vld [vmem:[#allocation4 + $0x34] sm:$0xf]
    %v68 = vld [vmem:[#allocation4 + $0x38] sm:$0xf]
    %v69 = vld [vmem:[#allocation4 + $0x3c] sm:$0xf]
    %v70 = vld [vmem:[#allocation4 + $0x40] sm:$0xf]
    %v71 = vld [vmem:[#allocation4 + $0x44] sm:$0xf]
    %v72 = vld [vmem:[#allocation6] sm:$0x1]
    %v73 = vld [vmem:[#allocation6 + $0x1] sm:$0x1]
    %v74 = vlaneseq
    %v75 = vshrl.u32 %v74, 7
    %v76 = vsub.s32 0, %v75
    %v77 = vrot.slane %v72, %v76
    %v80 = vunpack.c.l.b16 %v54
    %v81 = vunpack.c.l.b16 %v55
    %v82 = vpack.c.b16 %v81, %v80
    %vm84 = vcmask 130048
    %v86 = vsel %vm84, %v53, 0
    %88 = vmatprep.subr.bf16.mxu0 0
    %89 = vmatpush1.bf16.msra.mxu0 0
    %90 = vmatprep.subr.bf16.mxu0 0
    %91 = vmatpush1.bf16.msra.mxu0 0
    %92 = vmatprep.subr.bf16.mxu0 0
    %93 = vmatpush1.bf16.msra.mxu0 0
    %94 = vmatprep.subr.bf16.mxu0 0
    %95 = vmatpush1.bf16.msra.mxu0 0
    %96 = vmatprep.subr.bf16.mxu0 0
    %97 = vmatpush1.bf16.msra.mxu0 0
    %98 = vmatprep.subr.bf16.mxu0 0
    %99 = vmatpush1.bf16.msra.mxu0 0
    %100 = vmatprep.subr.bf16.mxu0 0
    %101 = vmatpush1.bf16.msra.mxu0 0
    %102 = vmatprep.subr.bf16.mxu0 0
    %103 = vmatpush1.bf16.msra.mxu0 %v82
    %104 = vmatprep.subr.bf16.mxu0 0
    %105 = vmatpush2.bf16.msra.mxu0 0
    %106 = vmatprep.subr.bf16.mxu0 0
    %107 = vmatpush2.bf16.msra.mxu0 0
    %108 = vmatprep.subr.bf16.mxu0 0
    %109 = vmatpush2.bf16.msra.mxu0 0
    %110 = vmatprep.subr.bf16.mxu0 0
    %111 = vmatpush2.bf16.msra.mxu0 0
    %112 = vmatprep.subr.bf16.mxu0 0
    %113 = vmatpush2.bf16.msra.mxu0 0
    %114 = vmatprep.subr.bf16.mxu0 0
    %115 = vmatpush2.bf16.msra.mxu0 0
    %116 = vmatprep.subr.bf16.mxu0 0
    %117 = vmatpush2.bf16.msra.mxu0 0
    %118 = vmatprep.subr.bf16.mxu0 0
    %119 = vmatpush2.bf16.msra.mxu0 0
    %120 = vmatprep.mubr.bf16.mxu0 0
    %121 = vmatmul.mubr.bf16.gmra.mxu0 %v86
    %v122 = vpop.f32.mrf.mxu0
    %v123 = vadd.f32 %v77, %v122
    %v124 = vpop.f32.mrf.mxu0
    %v125 = vpop.f32.mrf.mxu0
    %v126 = vpop.f32.mrf.mxu0
    %127 = vdwg.mxu0
    %v128 = vmax.f32 %v123, 0.0
    %v129 = vpack.c.bf16 %v128, %v128
    %v130 = vlaneseq
    %v131 = vshrl.u32 %v130, 7
    %v132 = vsub.s32 0, %v131
    %v133 = vrot.slane %v73, %v132
    %v150 = vunpack.c.l.b16 %v56
    %v151 = vunpack.c.l.b16 %v57
    %v152 = vunpack.c.l.b16 %v58
    %v153 = vunpack.c.l.b16 %v59
    %v154 = vunpack.c.l.b16 %v60
    %v155 = vunpack.c.l.b16 %v61
    %v156 = vunpack.c.l.b16 %v62
    %v157 = vunpack.c.l.b16 %v63
    %v158 = vunpack.c.l.b16 %v64
    %v159 = vunpack.c.l.b16 %v65
    %v160 = vunpack.c.l.b16 %v66
    %v161 = vunpack.c.l.b16 %v67
    %v162 = vunpack.c.l.b16 %v68
    %v163 = vunpack.c.l.b16 %v69
    %v164 = vunpack.c.l.b16 %v70
    %v165 = vunpack.c.l.b16 %v71
    %v166 = vpack.c.b16 %v151, %v150
    %v167 = vpack.c.b16 %v153, %v152
    %v168 = vpack.c.b16 %v155, %v154
    %v169 = vpack.c.b16 %v157, %v156
    %v170 = vpack.c.b16 %v159, %v158
    %v171 = vpack.c.b16 %v161, %v160
    %v172 = vpack.c.b16 %v163, %v162
    %v173 = vpack.c.b16 %v165, %v164
    %182 = vmatprep.subr.bf16.mxu0 0
    %183 = vmatpush1.bf16.msra.mxu0 %v173
    %184 = vmatprep.subr.bf16.mxu0 0
    %185 = vmatpush1.bf16.msra.mxu0 %v172
    %186 = vmatprep.subr.bf16.mxu0 0
    %187 = vmatpush1.bf16.msra.mxu0 %v171
    %188 = vmatprep.subr.bf16.mxu0 0
    %189 = vmatpush1.bf16.msra.mxu0 %v170
    %190 = vmatprep.subr.bf16.mxu0 0
    %191 = vmatpush1.bf16.msra.mxu0 %v169
    %192 = vmatprep.subr.bf16.mxu0 0
    %193 = vmatpush1.bf16.msra.mxu0 %v168
    %194 = vmatprep.subr.bf16.mxu0 0
    %195 = vmatpush1.bf16.msra.mxu0 %v167
    %196 = vmatprep.subr.bf16.mxu0 0
    %197 = vmatpush1.bf16.msra.mxu0 %v166
    %198 = vmatprep.subr.bf16.mxu0 0
    %199 = vmatpush2.bf16.msra.mxu0 0
    %200 = vmatprep.subr.bf16.mxu0 0
    %201 = vmatpush2.bf16.msra.mxu0 0
    %202 = vmatprep.subr.bf16.mxu0 0
    %203 = vmatpush2.bf16.msra.mxu0 0
    %204 = vmatprep.subr.bf16.mxu0 0
    %205 = vmatpush2.bf16.msra.mxu0 0
    %206 = vmatprep.subr.bf16.mxu0 0
    %207 = vmatpush2.bf16.msra.mxu0 0
    %208 = vmatprep.subr.bf16.mxu0 0
    %209 = vmatpush2.bf16.msra.mxu0 0
    %210 = vmatprep.subr.bf16.mxu0 0
    %211 = vmatpush2.bf16.msra.mxu0 0
    %212 = vmatprep.subr.bf16.mxu0 0
    %213 = vmatpush2.bf16.msra.mxu0 0
    %214 = vmatprep.mubr.bf16.mxu0 0
    %215 = vmatmul.mubr.bf16.gmra.mxu0 %v129
    %v216 = vpop.f32.mrf.mxu0
    %v217 = vadd.f32 %v133, %v216
    %v218 = vpop.f32.mrf.mxu0
    %v219 = vpop.f32.mrf.mxu0
    %v220 = vpop.f32.mrf.mxu0
    %221 = vdwg.mxu0
    %vm222 = vcmask 31744
    %223 = vst.msk [vmem:[%s3] sm:$0xff] %vm222, %v217
    // Predicated region
    $region26: #{tpu_custom_call.1} parent=1 // pred_check
      _
    $region27: #{tpu_custom_call.1} parent=1 // pred_check_branch
      %225 = sbr.rel (0) target = $region29
    $region28: #{tpu_custom_call.1} parent=1 // pred_region
      _
    $region29: #{tpu_custom_call.1} parent=1 // pred_fallthru
      _
    // Predicated region
    $region30: #{tpu_custom_call.1} parent=1 // pred_check
      _
    $region31: #{tpu_custom_call.1} parent=1 // pred_check_branch
      %227 = sbr.rel (0) target = $region33
    $region32: #{tpu_custom_call.1} parent=1 // pred_region
      _
    $region33: #{tpu_custom_call.1} parent=1 // pred_fallthru
      _
    %228 = vsyncpa [#allocation3], 1
    %229 = vsyncpa [#allocation5], 1

</llo_original>
